<compile_context>
chip_gen: v7x
topology: tpu7x:2x2x1
jax: 0.10.0
libtpu: 0.0.40
codegen_flags: <defaults>
</compile_context>

<pallas_src>
import jax
import jax.numpy as jnp
from jax import lax
from jax.experimental import pallas as pl
from jax.experimental.pallas import tpu as pltpu


def _gelu_exact(x):
    # PyTorch nn.GELU() default = exact erf formulation.
    return 0.5 * x * (1.0 + lax.erf(x / jnp.sqrt(2.0).astype(x.dtype)))


def head_kernel(x_ref, w1b_ref, b1_ref, w2b_ref, b2_ref, o_ref):
    # x_ref:   (TB, H, W*C)       TB (n,d)-slices, channels folded into lanes
    # w1b_ref: (W*C, W*C4)        block-diagonal pointwise weight
    # b1_ref:  (1, W*C4)
    # w2b_ref: (W*C4, 3*W*CO)     [band(dh=0) | band(dh=1) | band(dh=2)]
    # b2_ref:  (1, W*CO)
    # o_ref:   (TB, H, W*CO)      lane-dense output slab
    TB, H, WC = x_ref.shape
    WCO = o_ref.shape[2]
    M = TB * H

    x2 = x_ref[...].reshape(M, WC)  # merge leading dims only (layout-preserving)

    # ---- 1x1x1 conv as a single MXU matmul + exact GELU ----
    h1 = jnp.dot(x2, w1b_ref[...], preferred_element_type=jnp.float32) + b1_ref[...]
    h1 = _gelu_exact(h1)                                     # (M, W*C4)

    # ---- 3x3 spatial conv: W-taps baked into the banded weight (one matmul),
    #      H-taps via two sublane rolls + edge masks on the product. ----
    p = jnp.dot(h1, w2b_ref[...], preferred_element_type=jnp.float32)  # (M, 3*W*CO)
    p_top = p[:, 0 * WCO:1 * WCO]   # dh=0 tap: needs the row above (h-1)
    p_mid = p[:, 1 * WCO:2 * WCO]   # dh=1 tap: same row
    p_bot = p[:, 2 * WCO:3 * WCO]   # dh=2 tap: needs the row below (h+1)

    hpos = lax.broadcasted_iota(jnp.int32, (M, WCO), 0) % H
    from_above = jnp.where(hpos != 0,
                           pltpu.roll(p_top, shift=1, axis=0), 0.0)
    from_below = jnp.where(hpos != H - 1,
                           pltpu.roll(p_bot, shift=M - 1, axis=0), 0.0)

    y = p_mid + from_above + from_below + b2_ref[...]
    o_ref[...] = y.reshape(TB, H, WCO).astype(o_ref.dtype)


def _pick_tb(B, per_slice_bytes, budget_bytes=24 << 20):
    """Largest divisor of B that fits the VMEM budget and keeps >=2 grid steps
    (so the v7x megacore can shard the batch axis).  Budget assumes 2x
    double-buffered input+output tiles; 24 MiB keeps headroom on v7x (64 MiB)."""
    max_tb = max(1, budget_bytes // max(1, per_slice_bytes))
    best = 1
    for tb in range(1, B + 1):
        if B % tb == 0 and tb <= max_tb and B // tb >= 2:
            best = tb
    return best


def head_forward(x_ncdhw, w1, b1, w2, b2):
    """x: (N, C, D, H, W); w1: (C, C4); b1: (C4,); w2: (3, 3, C4, CO); b2: (CO,).
    Returns (N, CO, D, H, W), matching the PyTorch Head module."""
    N, C, D, H, W = x_ncdhw.shape
    C4 = w1.shape[1]
    CO = w2.shape[3]
    B = N * D
    WC, WC4, WCO = W * C, W * C4, W * CO

    # NCDHW -> (B, H, W*C). The reshape is free (same memory layout as NDHWC);
    # the transpose is required only because the module boundary is NCDHW.
    x_slab = jnp.transpose(x_ncdhw, (0, 2, 3, 4, 1)).reshape(B, H, WC)

    # Block-diagonal pointwise weight: W1B[w*C + c, w'*C4 + k] = [w==w'] * w1[c, k]
    w1b = (jnp.eye(W, dtype=w1.dtype)[:, None, :, None]
           * w1[None, :, None, :]).reshape(WC, WC4)
    b1t = jnp.tile(b1, W).reshape(1, WC4)

    # Banded 3x3 weight: for each H-tap dh, a (W*C4, W*CO) block-tridiagonal
    # matrix applying the three W-taps with the W zero-padding baked in.
    # TODO(synk): for very large W this weight scales as W^2; tile along W then.
    src = jnp.arange(W)[:, None]               # w_src
    dst = jnp.arange(W)[None, :]               # w_dst
    diff = src - dst
    dwi = jnp.clip(diff + 1, 0, 2)             # W-tap index
    valid = (jnp.abs(diff) <= 1)[None, :, :, None, None]
    band = jnp.where(valid, w2[:, dwi], 0.0)   # (3, Wsrc, Wdst, C4, CO)
    band = band.transpose(0, 1, 3, 2, 4).reshape(3, WC4, WCO)
    w2b = jnp.concatenate([band[0], band[1], band[2]], axis=1)  # (W*C4, 3*W*CO)
    b2t = jnp.tile(b2, W).reshape(1, WCO)

    TB = _pick_tb(B, per_slice_bytes=2 * H * W * (C + CO) * 4)

    out_slab = pl.pallas_call(
        head_kernel,
        out_shape=jax.ShapeDtypeStruct((B, H, WCO), jnp.float32),
        grid_spec=pltpu.PrefetchScalarGridSpec(
            num_scalar_prefetch=0,
            grid=(B // TB,),
            in_specs=[
                pl.BlockSpec((TB, H, WC), lambda b: (b, 0, 0)),
                pl.BlockSpec((WC, WC4), lambda b: (0, 0)),
                pl.BlockSpec((1, WC4), lambda b: (0, 0)),
                pl.BlockSpec((WC4, 3 * WCO), lambda b: (0, 0)),
                pl.BlockSpec((1, WCO), lambda b: (0, 0)),
            ],
            out_specs=pl.BlockSpec((TB, H, WCO), lambda b: (b, 0, 0)),
        ),
        compiler_params=pltpu.CompilerParams(
            dimension_semantics=("parallel",),
            vmem_limit_bytes=32 * 1024 * 1024),
    )(x_slab, w1b, b1t, w2b, b2t)

    # (B, H, W*CO) -> (N, D, H, W, CO) -> (N, CO, D, H, W)
    return jnp.transpose(out_slab.reshape(N, D, H, W, CO), (0, 4, 1, 2, 3))


def head_reference(x_ncdhw, w1, b1, w2, b2):
    """Pure-JAX reference mirroring the PyTorch module (for verification)."""
    N, C, D, H, W = x_ncdhw.shape
    CO = w2.shape[3]
    x = jnp.transpose(x_ncdhw, (0, 2, 3, 4, 1))          # (N, D, H, W, C)
    h1 = jnp.einsum('ndhwc,ck->ndhwk', x, w1) + b1
    h1 = _gelu_exact(h1)
    h1p = jnp.pad(h1, ((0, 0), (0, 0), (1, 1), (1, 1), (0, 0)))
    out = jnp.zeros((N, D, H, W, CO), jnp.float32)
    for dh in range(3):
        for dw in range(3):
            out = out + jnp.einsum('ndhwc,co->ndhwo',
                                   h1p[:, :, dh:dh + H, dw:dw + W, :],
                                   w2[dh, dw])
    out = out + b2
    return jnp.transpose(out, (0, 4, 1, 2, 3))            # (N, CO, D, H, W)


if __name__ == "__main__":
    # Small deterministic config: in_chan=32 (so in_chan//4=8), out_chan=16.
    N, C, D, H, W = 2, 32, 3, 8, 8
    C4, CO = C // 4, 16

    key = jax.random.PRNGKey(0)
    kx, k1, k2, k3, k4 = jax.random.split(key, 5)

    x = jax.random.normal(kx, (N, C, D, H, W), dtype=jnp.float32)

    # Deterministic synthetic parameters (channels-last storage for matmul use:
    # w1 (C, C4), w2 (3, 3, C4, CO); same math as nn.Conv3d weights).
    w1 = 0.1 * jax.random.normal(k1, (C, C4), dtype=jnp.float32)
    b1 = 0.1 * jax.random.normal(k2, (C4,), dtype=jnp.float32)
    w2 = 0.1 * jax.random.normal(k3, (3, 3, C4, CO), dtype=jnp.float32)
    b2 = 0.1 * jax.random.normal(k4, (CO,), dtype=jnp.float32)

    out = jax.block_until_ready(head_forward(x, w1, b1, w2, b2))
    ref = jax.block_until_ready(head_reference(x, w1, b1, w2, b2))

    assert out.shape == (N, CO, D, H, W), out.shape
    max_err = float(jnp.max(jnp.abs(out - ref)))
    assert jnp.allclose(out, ref, atol=1e-4, rtol=1e-4), max_err

    print("KERNEL_OK")
</pallas_src>

<mosaic_0001>
module attributes {stable_mosaic.version = 11 : i64} {
  func.func @head_kernel(%arg0: i32, %arg1: memref<3x8x256xf32, #tpu.memory_space<vmem>>, %arg2: memref<256x64xf32, #tpu.memory_space<vmem>>, %arg3: memref<1x64xf32, #tpu.memory_space<vmem>>, %arg4: memref<64x384xf32, #tpu.memory_space<vmem>>, %arg5: memref<1x128xf32, #tpu.memory_space<vmem>>, %arg6: memref<3x8x128xf32, #tpu.memory_space<vmem>>) attributes {dimension_semantics = [#tpu.dimension_semantics<parallel>], iteration_bounds = array<i64: 2>, scalar_prefetch = 0 : i64, scratch_operands = 0 : i64, tpu.core_type = #tpu.core_type<tc>, window_params = [{transform_indices = @transform_0, window_bounds = array<i64: 3, 8, 256>}, {pipeline_mode = #tpu.pipeline_mode<synchronous>, transform_indices = @transform_1, window_bounds = array<i64: 256, 64>}, {pipeline_mode = #tpu.pipeline_mode<synchronous>, transform_indices = @transform_2, window_bounds = array<i64: 1, 64>}, {pipeline_mode = #tpu.pipeline_mode<synchronous>, transform_indices = @transform_3, window_bounds = array<i64: 64, 384>}, {pipeline_mode = #tpu.pipeline_mode<synchronous>, transform_indices = @transform_4, window_bounds = array<i64: 1, 128>}, {transform_indices = @transform_5, window_bounds = array<i64: 3, 8, 128>}]} {
    %c0 = arith.constant 0 : index
    %c0_0 = arith.constant 0 : index
    %c0_1 = arith.constant 0 : index
    %0 = vector.load %arg1[%c0, %c0_0, %c0_1] : memref<3x8x256xf32, #tpu.memory_space<vmem>>, vector<3x8x256xf32>
    %1 = vector.shape_cast %0 : vector<3x8x256xf32> to vector<24x256xf32>
    %c0_2 = arith.constant 0 : index
    %c0_3 = arith.constant 0 : index
    %2 = vector.load %arg2[%c0_2, %c0_3] : memref<256x64xf32, #tpu.memory_space<vmem>>, vector<256x64xf32>
    %cst = arith.constant dense<0.000000e+00> : vector<24x64xf32>
    %3 = tpu.matmul %1, %2, %cst {dimension_numbers = #tpu.dot_dimension_numbers<[1], [0], [0], [1], [0, 0, 1, 1], [], []>} : vector<24x256xf32>, vector<256x64xf32>, vector<24x64xf32> -> vector<24x64xf32>
    %c0_4 = arith.constant 0 : index
    %c0_5 = arith.constant 0 : index
    %4 = vector.load %arg3[%c0_4, %c0_5] : memref<1x64xf32, #tpu.memory_space<vmem>>, vector<1x64xf32>
    %5 = vector.broadcast %4 : vector<1x64xf32> to vector<24x64xf32>
    %6 = arith.addf %3, %5 : vector<24x64xf32>
    %cst_6 = arith.constant 5.000000e-01 : f32
    %7 = vector.broadcast %cst_6 : f32 to vector<24x64xf32>
    %8 = arith.mulf %7, %6 : vector<24x64xf32>
    %cst_7 = arith.constant 2.000000e+00 : f32
    %9 = math.sqrt %cst_7 : f32
    %10 = vector.broadcast %9 : f32 to vector<24x64xf32>
    %11 = arith.divf %6, %10 : vector<24x64xf32>
    %12 = math.erf %11 : vector<24x64xf32>
    %cst_8 = arith.constant 1.000000e+00 : f32
    %13 = vector.broadcast %cst_8 : f32 to vector<24x64xf32>
    %14 = arith.addf %13, %12 : vector<24x64xf32>
    %15 = arith.mulf %8, %14 : vector<24x64xf32>
    %c0_9 = arith.constant 0 : index
    %c0_10 = arith.constant 0 : index
    %16 = vector.load %arg4[%c0_9, %c0_10] : memref<64x384xf32, #tpu.memory_space<vmem>>, vector<64x384xf32>
    %cst_11 = arith.constant dense<0.000000e+00> : vector<24x384xf32>
    %17 = tpu.matmul %15, %16, %cst_11 {dimension_numbers = #tpu.dot_dimension_numbers<[1], [0], [0], [1], [0, 0, 1, 1], [], []>} : vector<24x64xf32>, vector<64x384xf32>, vector<24x384xf32> -> vector<24x384xf32>
    %18 = vector.extract_strided_slice %17 {offsets = [0, 0], sizes = [24, 128], strides = [1, 1]} : vector<24x384xf32> to vector<24x128xf32>
    %19 = vector.extract_strided_slice %17 {offsets = [0, 128], sizes = [24, 128], strides = [1, 1]} : vector<24x384xf32> to vector<24x128xf32>
    %20 = vector.extract_strided_slice %17 {offsets = [0, 256], sizes = [24, 128], strides = [1, 1]} : vector<24x384xf32> to vector<24x128xf32>
    %21 = tpu.iota {dimensions = array<i32: 0>} : vector<24x128xi32>
    %c8_i32 = arith.constant 8 : i32
    %c0_i32 = arith.constant 0 : i32
    %22 = arith.cmpi eq, %c8_i32, %c0_i32 : i32
    %c1_i32 = arith.constant 1 : i32
    %23 = arith.select %22, %c1_i32, %c8_i32 : i32
    %24 = vector.broadcast %23 : i32 to vector<24x128xi32>
    %25 = arith.remsi %21, %24 : vector<24x128xi32>
    %c0_i32_12 = arith.constant 0 : i32
    %26 = vector.broadcast %c0_i32_12 : i32 to vector<24x128xi32>
    %27 = arith.cmpi ne, %25, %26 : vector<24x128xi32>
    %c0_i32_13 = arith.constant 0 : i32
    %28 = vector.broadcast %c0_i32_13 : i32 to vector<24x128xi32>
    %29 = arith.cmpi slt, %25, %28 : vector<24x128xi32>
    %c0_i32_14 = arith.constant 0 : i32
    %30 = arith.cmpi slt, %23, %c0_i32_14 : i32
    %31 = vector.broadcast %30 : i1 to vector<24x128xi1>
    %32 = vector.broadcast %31 : vector<24x128xi1> to vector<24x128xi1>
    %33 = arith.xori %29, %32 : vector<24x128xi1>
    %34 = arith.andi %33, %27 : vector<24x128xi1>
    %35 = vector.broadcast %23 : i32 to vector<24x128xi32>
    %36 = arith.addi %25, %35 : vector<24x128xi32>
    %37 = arith.select %34, %36, %25 : vector<24x128xi1>, vector<24x128xi32>
    %c0_i32_15 = arith.constant 0 : i32
    %38 = vector.broadcast %c0_i32_15 : i32 to vector<24x128xi32>
    %39 = arith.cmpi ne, %37, %38 : vector<24x128xi32>
    %c1_i32_16 = arith.constant 1 : i32
    %40 = tpu.dynamic_rotate %18 by %c1_i32_16 dim 0 : vector<24x128xf32>, i32 -> vector<24x128xf32>
    %cst_17 = arith.constant 0.000000e+00 : f32
    %41 = vector.broadcast %cst_17 : f32 to vector<24x128xf32>
    %42 = arith.select %39, %40, %41 : vector<24x128xi1>, vector<24x128xf32>
    %c7_i32 = arith.constant 7 : i32
    %43 = vector.broadcast %c7_i32 : i32 to vector<24x128xi32>
    %44 = arith.cmpi ne, %37, %43 : vector<24x128xi32>
    %c23_i32 = arith.constant 23 : i32
    %45 = tpu.dynamic_rotate %20 by %c23_i32 dim 0 : vector<24x128xf32>, i32 -> vector<24x128xf32>
    %cst_18 = arith.constant 0.000000e+00 : f32
    %46 = vector.broadcast %cst_18 : f32 to vector<24x128xf32>
    %47 = arith.select %44, %45, %46 : vector<24x128xi1>, vector<24x128xf32>
    %48 = arith.addf %19, %42 : vector<24x128xf32>
    %49 = arith.addf %48, %47 : vector<24x128xf32>
    %c0_19 = arith.constant 0 : index
    %c0_20 = arith.constant 0 : index
    %50 = vector.load %arg5[%c0_19, %c0_20] : memref<1x128xf32, #tpu.memory_space<vmem>>, vector<1x128xf32>
    %51 = vector.broadcast %50 : vector<1x128xf32> to vector<24x128xf32>
    %52 = arith.addf %49, %51 : vector<24x128xf32>
    %53 = vector.shape_cast %52 : vector<24x128xf32> to vector<3x8x128xf32>
    %c0_21 = arith.constant 0 : index
    %c0_22 = arith.constant 0 : index
    %c0_23 = arith.constant 0 : index
    %54 = vector.load %arg6[%c0_21, %c0_22, %c0_23] : memref<3x8x128xf32, #tpu.memory_space<vmem>>, vector<3x8x128xf32>
    tpu.vector_store %arg6[%c0_21, %c0_22, %c0_23], %53 {strides = array<i32>} : memref<3x8x128xf32, #tpu.memory_space<vmem>>, vector<3x8x128xf32>,
    return
  }
  func.func @transform_0(%arg0: i32) -> (i32, i32, i32) {
    %c0_i32 = arith.constant 0 : i32
    %c0_i32_0 = arith.constant 0 : i32
    %c0_i32_1 = arith.constant 0 : i32
    return %arg0, %c0_i32, %c0_i32_0 : i32, i32, i32
  }
  func.func @transform_1(%arg0: i32) -> (i32, i32) {
    %c0_i32 = arith.constant 0 : i32
    %c0_i32_0 = arith.constant 0 : i32
    %c0_i32_1 = arith.constant 0 : i32
    return %c0_i32, %c0_i32_0 : i32, i32
  }
  func.func @transform_2(%arg0: i32) -> (i32, i32) {
    %c0_i32 = arith.constant 0 : i32
    %c0_i32_0 = arith.constant 0 : i32
    %c0_i32_1 = arith.constant 0 : i32
    return %c0_i32, %c0_i32_0 : i32, i32
  }
  func.func @transform_3(%arg0: i32) -> (i32, i32) {
    %c0_i32 = arith.constant 0 : i32
    %c0_i32_0 = arith.constant 0 : i32
    %c0_i32_1 = arith.constant 0 : i32
    return %c0_i32, %c0_i32_0 : i32, i32
  }
  func.func @transform_4(%arg0: i32) -> (i32, i32) {
    %c0_i32 = arith.constant 0 : i32
    %c0_i32_0 = arith.constant 0 : i32
    %c0_i32_1 = arith.constant 0 : i32
    return %c0_i32, %c0_i32_0 : i32, i32
  }
  func.func @transform_5(%arg0: i32) -> (i32, i32, i32) {
    %c0_i32 = arith.constant 0 : i32
    %c0_i32_0 = arith.constant 0 : i32
    %c0_i32_1 = arith.constant 0 : i32
    return %arg0, %c0_i32, %c0_i32_0 : i32, i32, i32
  }
}

</mosaic_0001>

<llo_original>
// kernel: tpu_custom_call.1
$region0: #{tpu_custom_call.1}
  #allocation0 [shape = 'u32[]', space=smem, size = 0x4, offset = 0x4, fixed_abs, tag = 'smem constant byte address 0x4 - core index']
  #allocation1 [shape = 'u32[144,128]{1,0:T(1,128)}', space=vmem, size = 0x12000, scoped, tag = 'internal scratch']
  %s0 = inlined_call_operand.vmem [shape: f32[6,8,256], index: 0, kind: input, shape index: {}]
  %s1 = inlined_call_operand.vmem [shape: f32[256,64], index: 1, kind: input, shape index: {}]
  %s2 = inlined_call_operand.vmem [shape: f32[1,64], index: 2, kind: input, shape index: {}]
  %s3 = inlined_call_operand.vmem [shape: f32[64,384], index: 3, kind: input, shape index: {}]
  %s4 = inlined_call_operand.vmem [shape: f32[1,128], index: 4, kind: input, shape index: {}]
  %s5 = inlined_call_operand.hbm [shape: f32[6,8,128], index: 5, kind: output, shape index: {}]
  %s6 = sld [smem:[#allocation0]]
  $region53: #{tpu_custom_call.1} parent=0
    _
  %s8 = ssub.s32 1, %s6
  %s9 = scalar_select 0, %s8, %s6
  $region1: #{tpu_custom_call.1} parent=0
    #allocation2 [shape = 'u8[24576]{0}', space=vmem, size = 0x6000, scoped, tag = 'output window, operand 0']
    #allocation3 [shape = 's32[2]{0}', space=sflag, size = 0x8, scoped, tag = 'scoped memory for tpu_custom_call.1']
    %10 = vsyncpa [#allocation3], 0
    %s11 = scalar_lea.sflag [#allocation3], 1
    %12 = vsyncpa %s11, 0
    loop: start=0, step=1, limit=4
    $region2: #{tpu_custom_call.1} parent=1 // loop_pre_header
      _
    $region3: #{tpu_custom_call.1} parent=1 // loop_header
      %s14 = sphi 0, %s18
      %p15 = scmp.ge.s32.totalorder %s14, 4
      %s24 = sphi 0, %s26
      %s27 = sphi 0, %s24
      %s28 = sphi 0, %s27
      %s44 = sphi 0, %s28
      %s48 = sphi 0, %s48
      %s50 = sphi 0, %s48
      %s51 = sphi 0, %s50
      %s65 = sphi 0, %s51
      %s69 = sphi 0, %s69
      %s71 = sphi 0, %s69
      %s72 = sphi 0, %s71
      %s86 = sphi 0, %s72
      %s90 = sphi 0, %s90
      %s92 = sphi 0, %s90
      %s93 = sphi 0, %s92
      %s107 = sphi 0, %s93
      %s111 = sphi 0, %s111
      %s113 = sphi 0, %s111
      %s114 = sphi 0, %s113
      %s128 = sphi 0, %s114
      %s134 = sphi 0, %s136
      %s137 = sphi 0, %s134
      %s138 = sphi 0, %s137
      %s154 = sphi 0, %s138
    $region4: #{tpu_custom_call.1} parent=1 // loop_header_branch
      %17 = sbr.rel (%p15) target = $region8
    $region5: #{tpu_custom_call.1} parent=1 // loop_body
      %s19 = ssub.s32 %s14, 1
      %s20 = ssub.s32 %s14, 2
      %s21 = sadd.s32 %s14, 1
      %s22 = ssub.s32 %s14, %s21
      %p23 = scmp.eq.s32.totalorder %s22, 0
      %s25 = sadd.s32 %s24, 1
      %s26 = scalar_select %p23, %s24, %s25
      %p29 = pneg %p23
      %p30 = scmp.eq.s32.totalorder %s14, 1
      %p31 = por %p29, %p30
      %p32 = scmp.ne.s32.totalorder %s24, %s27
      %p33 = scmp.eq.s32.totalorder %s14, 0
      %p34 = por %p32, %p33
      %p35 = scmp.ne.s32.totalorder %s24, %s27
      %p36 = scmp.eq.s32.totalorder %s19, 1
      %p37 = por %p35, %p36
      %p38 = scmp.ne.s32.totalorder %s27, %s28
      %p39 = scmp.eq.s32.totalorder %s19, 0
      %p40 = por %p38, %p39
      %p41 = scmp.ne.s32.totalorder %s27, %s28
      %p42 = scmp.eq.s32.totalorder %s20, 1
      %p43 = por %p41, %p42
      %p45 = scmp.ne.s32.totalorder %s28, %s44
      %p46 = scmp.eq.s32.totalorder %s20, 0
      %p47 = por %p45, %p46
      %s49 = sadd.s32 %s48, 1
      %p52 = scmp.eq.s32.totalorder %s14, 1
      %p53 = scmp.ne.s32.totalorder %s48, %s50
      %p54 = scmp.eq.s32.totalorder %s14, 0
      %p55 = por %p53, %p54
      %p56 = scmp.ne.s32.totalorder %s48, %s50
      %p57 = scmp.eq.s32.totalorder %s19, 1
      %p58 = por %p56, %p57
      %p59 = scmp.ne.s32.totalorder %s50, %s51
      %p60 = scmp.eq.s32.totalorder %s19, 0
      %p61 = por %p59, %p60
      %p62 = scmp.ne.s32.totalorder %s50, %s51
      %p63 = scmp.eq.s32.totalorder %s20, 1
      %p64 = por %p62, %p63
      %p66 = scmp.ne.s32.totalorder %s51, %s65
      %p67 = scmp.eq.s32.totalorder %s20, 0
      %p68 = por %p66, %p67
      %s70 = sadd.s32 %s69, 1
      %p73 = scmp.eq.s32.totalorder %s14, 1
      %p74 = scmp.ne.s32.totalorder %s69, %s71
      %p75 = scmp.eq.s32.totalorder %s14, 0
      %p76 = por %p74, %p75
      %p77 = scmp.ne.s32.totalorder %s69, %s71
      %p78 = scmp.eq.s32.totalorder %s19, 1
      %p79 = por %p77, %p78
      %p80 = scmp.ne.s32.totalorder %s71, %s72
      %p81 = scmp.eq.s32.totalorder %s19, 0
      %p82 = por %p80, %p81
      %p83 = scmp.ne.s32.totalorder %s71, %s72
      %p84 = scmp.eq.s32.totalorder %s20, 1
      %p85 = por %p83, %p84
      %p87 = scmp.ne.s32.totalorder %s72, %s86
      %p88 = scmp.eq.s32.totalorder %s20, 0
      %p89 = por %p87, %p88
      %s91 = sadd.s32 %s90, 1
      %p94 = scmp.eq.s32.totalorder %s14, 1
      %p95 = scmp.ne.s32.totalorder %s90, %s92
      %p96 = scmp.eq.s32.totalorder %s14, 0
      %p97 = por %p95, %p96
      %p98 = scmp.ne.s32.totalorder %s90, %s92
      %p99 = scmp.eq.s32.totalorder %s19, 1
      %p100 = por %p98, %p99
      %p101 = scmp.ne.s32.totalorder %s92, %s93
      %p102 = scmp.eq.s32.totalorder %s19, 0
      %p103 = por %p101, %p102
      %p104 = scmp.ne.s32.totalorder %s92, %s93
      %p105 = scmp.eq.s32.totalorder %s20, 1
      %p106 = por %p104, %p105
      %p108 = scmp.ne.s32.totalorder %s93, %s107
      %p109 = scmp.eq.s32.totalorder %s20, 0
      %p110 = por %p108, %p109
      %s112 = sadd.s32 %s111, 1
      %p115 = scmp.eq.s32.totalorder %s14, 1
      %p116 = scmp.ne.s32.totalorder %s111, %s113
      %p117 = scmp.eq.s32.totalorder %s14, 0
      %p118 = por %p116, %p117
      %p119 = scmp.ne.s32.totalorder %s111, %s113
      %p120 = scmp.eq.s32.totalorder %s19, 1
      %p121 = por %p119, %p120
      %p122 = scmp.ne.s32.totalorder %s113, %s114
      %p123 = scmp.eq.s32.totalorder %s19, 0
      %p124 = por %p122, %p123
      %p125 = scmp.ne.s32.totalorder %s113, %s114
      %p126 = scmp.eq.s32.totalorder %s20, 1
      %p127 = por %p125, %p126
      %p129 = scmp.ne.s32.totalorder %s114, %s128
      %p130 = scmp.eq.s32.totalorder %s20, 0
      %p131 = por %p129, %p130
      %s132 = ssub.s32 %s14, %s21
      %p133 = scmp.eq.s32.totalorder %s132, 0
      %s135 = sadd.s32 %s134, 1
      %s136 = scalar_select %p133, %s134, %s135
      %p139 = pneg %p133
      %p140 = scmp.eq.s32.totalorder %s14, 1
      %p141 = por %p139, %p140
      %p142 = scmp.ne.s32.totalorder %s134, %s137
      %p143 = scmp.eq.s32.totalorder %s14, 0
      %p144 = por %p142, %p143
      %p145 = scmp.ne.s32.totalorder %s134, %s137
      %p146 = scmp.eq.s32.totalorder %s19, 1
      %p147 = por %p145, %p146
      %p148 = scmp.ne.s32.totalorder %s137, %s138
      %p149 = scmp.eq.s32.totalorder %s19, 0
      %p150 = por %p148, %p149
      %p151 = scmp.ne.s32.totalorder %s137, %s138
      %p152 = scmp.eq.s32.totalorder %s20, 1
      %p153 = por %p151, %p152
      %p155 = scmp.ne.s32.totalorder %s138, %s154
      %p156 = scmp.eq.s32.totalorder %s20, 0
      %p157 = por %p155, %p156
      %p158 = scmp.le.s32.totalorder 1, %s14
      %p159 = scmp.lt.s32.totalorder %s14, 3
      %p160 = pnand %p158, %p159
      %p161 = pneg %p160
      // Predicated region
      $region9: #{tpu_custom_call.1} parent=5 // pred_check
        _
      $region10: #{tpu_custom_call.1} parent=5 // pred_check_branch
        %163 = sbr.rel (%p160) target = $region12
      $region11: #{tpu_custom_call.1} parent=5 // pred_region
        %s164 = ssub.s32 %s14, 1
        // Predicated region
        $region13: #{tpu_custom_call.1} parent=11 // pred_check
          %p165 = pneg %p61
        $region14: #{tpu_custom_call.1} parent=11 // pred_check_branch
          %167 = sbr.rel (%p165) target = $region16
        $region15: #{tpu_custom_call.1} parent=11 // pred_region
          _
        $region16: #{tpu_custom_call.1} parent=11 // pred_fallthru
          _
        // Predicated region
        $region17: #{tpu_custom_call.1} parent=11 // pred_check
          %p168 = pneg %p82
        $region18: #{tpu_custom_call.1} parent=11 // pred_check_branch
          %170 = sbr.rel (%p168) target = $region20
        $region19: #{tpu_custom_call.1} parent=11 // pred_region
          _
        $region20: #{tpu_custom_call.1} parent=11 // pred_fallthru
          _
        // Predicated region
        $region21: #{tpu_custom_call.1} parent=11 // pred_check
          %p171 = pneg %p103
        $region22: #{tpu_custom_call.1} parent=11 // pred_check_branch
          %173 = sbr.rel (%p171) target = $region24
        $region23: #{tpu_custom_call.1} parent=11 // pred_region
          _
        $region24: #{tpu_custom_call.1} parent=11 // pred_fallthru
          _
        // Predicated region
        $region25: #{tpu_custom_call.1} parent=11 // pred_check
          %p174 = pneg %p124
        $region26: #{tpu_custom_call.1} parent=11 // pred_check_branch
          %176 = sbr.rel (%p174) target = $region28
        $region27: #{tpu_custom_call.1} parent=11 // pred_region
          _
        $region28: #{tpu_custom_call.1} parent=11 // pred_fallthru
          _
      $region12: #{tpu_custom_call.1} parent=5 // pred_fallthru
        _
      %p177 = scmp.lt.s32.totalorder %s14, 2
      // Predicated region
      $region29: #{tpu_custom_call.1} parent=5 // pred_check
        %p178 = pneg %p177
      $region30: #{tpu_custom_call.1} parent=5 // pred_check_branch
        %180 = sbr.rel (%p178) target = $region32
      $region31: #{tpu_custom_call.1} parent=5 // pred_region
        // Predicated region
        $region33: #{tpu_custom_call.1} parent=31 // pred_check
          %p181 = pneg %p34
        $region34: #{tpu_custom_call.1} parent=31 // pred_check_branch
          %183 = sbr.rel (%p181) target = $region36
        $region35: #{tpu_custom_call.1} parent=31 // pred_region
          %s184 = smul.u32 3, %s14
          %p185 = scmp.lt.s32.totalorder %s184, 5
          %s186 = scalar_select %p185, %s184, 5
          %s187 = smul.addr %s186, 2
          %s188 = smul.addr %s187, 8
          %s189 = scalar_lea.vmem %s0, %s188
          %s190 = smul.u32 3, %s14
        $region36: #{tpu_custom_call.1} parent=31 // pred_fallthru
          _
      $region32: #{tpu_custom_call.1} parent=5 // pred_fallthru
        _
      %p191 = scmp.le.s32.totalorder 1, %s14
      %p192 = scmp.lt.s32.totalorder %s14, 3
      %p193 = pnand %p191, %p192
      %p194 = pneg %p193
      // Predicated region
      $region37: #{tpu_custom_call.1} parent=5 // pred_check
        _
      $region38: #{tpu_custom_call.1} parent=5 // pred_check_branch
        %196 = sbr.rel (%p193) target = $region40
      $region39: #{tpu_custom_call.1} parent=5 // pred_region
        %s197 = ssub.s32 %s14, 1
        %s198 = smul.u32 3, %s19
        %p199 = scmp.lt.s32.totalorder %s198, 5
        %s200 = scalar_select %p199, %s198, 5
        %s201 = smul.addr %s200, 2
        %s202 = smul.addr %s201, 8
        %s203 = scalar_lea.vmem %s0, %s202
        %p204 = pneg %p40
        %p205 = pneg %p37
        %p206 = pneg %p61
        %p207 = pneg %p58
        %p208 = pneg %p82
        %p209 = pneg %p79
        %p210 = pneg %p103
        %p211 = pneg %p100
        %p212 = pneg %p124
        %p213 = pneg %p121
        %p214 = pneg %p150
        %p215 = pneg %p147
        %s216 = sand.u32 %s137, 1
        %s217 = scalar_lea.sflag [#allocation3], %s216
        %s218 = sand.u32 %s137, 1
        %s219 = smul.addr %s218, 24
        %s220 = scalar_lea.vmem [#allocation2], %s219
        %s221 = smul.u32 3, %s19
        %p222 = scmp.lt.s32.totalorder %s221, 5
        %s223 = scalar_select %p222, %s221, 5
        %s224 = smul.addr %s223, 2
        %s225 = smul.addr %s224, 8
        %s226 = scalar_lea.vmem %s0, %s225
        %s227 = smul.u32 3, %s19
        %s228 = smul.u32 3, %s19
        %v229 = vld [vmem:[%s226] sm:$0xff]
        %v230 = vld [vmem:[%s226 + $0x8] sm:$0xff]
        %v231 = vld [vmem:[%s226 + $0x10] sm:$0xff]
        %v232 = vld [vmem:[%s226 + $0x18] sm:$0xff]
        %v233 = vld [vmem:[%s226 + $0x20] sm:$0xff]
        %v234 = vld [vmem:[%s226 + $0x28] sm:$0xff]
        %v235 = vld [vmem:[%s1] sm:$0xff]
        %v236 = vld [vmem:[%s1 + $0x8] sm:$0xff]
        %v237 = vld [vmem:[%s1 + $0x10] sm:$0xff]
        %v238 = vld [vmem:[%s1 + $0x18] sm:$0xff]
        %v239 = vld [vmem:[%s1 + $0x20] sm:$0xff]
        %v240 = vld [vmem:[%s1 + $0x28] sm:$0xff]
        %v241 = vld [vmem:[%s1 + $0x30] sm:$0xff]
        %v242 = vld [vmem:[%s1 + $0x38] sm:$0xff]
        %v243 = vld [vmem:[%s1 + $0x40] sm:$0xff]
        %v244 = vld [vmem:[%s1 + $0x48] sm:$0xff]
        %v245 = vld [vmem:[%s1 + $0x50] sm:$0xff]
        %v246 = vld [vmem:[%s1 + $0x58] sm:$0xff]
        %v247 = vld [vmem:[%s1 + $0x60] sm:$0xff]
        %v248 = vld [vmem:[%s1 + $0x68] sm:$0xff]
        %v249 = vld [vmem:[%s1 + $0x70] sm:$0xff]
        %v250 = vld [vmem:[%s1 + $0x78] sm:$0xff]
        %v251 = vld [vmem:[%s1 + $0x80] sm:$0xff]
        %v252 = vld [vmem:[%s1 + $0x88] sm:$0xff]
        %v253 = vld [vmem:[%s1 + $0x90] sm:$0xff]
        %v254 = vld [vmem:[%s1 + $0x98] sm:$0xff]
        %v255 = vld [vmem:[%s1 + $0xa0] sm:$0xff]
        %v256 = vld [vmem:[%s1 + $0xa8] sm:$0xff]
        %v257 = vld [vmem:[%s1 + $0xb0] sm:$0xff]
        %v258 = vld [vmem:[%s1 + $0xb8] sm:$0xff]
        %v259 = vld [vmem:[%s1 + $0xc0] sm:$0xff]
        %v260 = vld [vmem:[%s1 + $0xc8] sm:$0xff]
        %v261 = vld [vmem:[%s1 + $0xd0] sm:$0xff]
        %v262 = vld [vmem:[%s1 + $0xd8] sm:$0xff]
        %v263 = vld [vmem:[%s1 + $0xe0] sm:$0xff]
        %v264 = vld [vmem:[%s1 + $0xe8] sm:$0xff]
        %v265 = vld [vmem:[%s1 + $0xf0] sm:$0xff]
        %v266 = vld [vmem:[%s1 + $0xf8] sm:$0xff]
        %v267 = vld [vmem:[%s2] sm:$0x1]
        %v269 = vlaneseq
        %v270 = vshrl.u32 %v269, 7
        %v271 = vsub.s32 0, %v270
        %v272 = vrot.slane %v267, %v271
        %274 = vmatprep.subr.mxu0 0.0
        %275 = vmatpush1.msra.mxu0 %v235
        %276 = vmatprep.subr.mxu0 0.0
        %277 = vmatpush1.msra.mxu0 %v236
        %278 = vmatprep.subr.mxu0 0.0
        %279 = vmatpush1.msra.mxu0 %v237
        %280 = vmatprep.subr.mxu0 0.0
        %281 = vmatpush1.msra.mxu0 %v238
        %282 = vmatprep.subr.mxu0 0.0
        %283 = vmatpush1.msra.mxu0 %v239
        %284 = vmatprep.subr.mxu0 0.0
        %285 = vmatpush1.msra.mxu0 %v240
        %286 = vmatprep.subr.mxu0 0.0
        %287 = vmatpush1.msra.mxu0 %v241
        %288 = vmatprep.subr.mxu0 0.0
        %289 = vmatpush1.msra.mxu0 %v242
        %290 = vmatprep.subr.mxu0 0.0
        %291 = vmatpush1.msra.mxu0 %v243
        %292 = vmatprep.subr.mxu0 0.0
        %293 = vmatpush1.msra.mxu0 %v244
        %294 = vmatprep.subr.mxu0 0.0
        %295 = vmatpush1.msra.mxu0 %v245
        %296 = vmatprep.subr.mxu0 0.0
        %297 = vmatpush1.msra.mxu0 %v246
        %298 = vmatprep.subr.mxu0 0.0
        %299 = vmatpush1.msra.mxu0 %v247
        %300 = vmatprep.subr.mxu0 0.0
        %301 = vmatpush1.msra.mxu0 %v248
        %302 = vmatprep.subr.mxu0 0.0
        %303 = vmatpush1.msra.mxu0 %v249
        %304 = vmatprep.subr.mxu0 0.0
        %305 = vmatpush1.msra.mxu0 %v250
        %306 = vmatprep.subr.mxu0 0.0
        %307 = vmatpush1.msra.mxu0 %v251
        %308 = vmatprep.subr.mxu0 0.0
        %309 = vmatpush1.msra.mxu0 %v252
        %310 = vmatprep.subr.mxu0 0.0
        %311 = vmatpush1.msra.mxu0 %v253
        %312 = vmatprep.subr.mxu0 0.0
        %313 = vmatpush1.msra.mxu0 %v254
        %314 = vmatprep.subr.mxu0 0.0
        %315 = vmatpush1.msra.mxu0 %v255
        %316 = vmatprep.subr.mxu0 0.0
        %317 = vmatpush1.msra.mxu0 %v256
        %318 = vmatprep.subr.mxu0 0.0
        %319 = vmatpush1.msra.mxu0 %v257
        %320 = vmatprep.subr.mxu0 0.0
        %321 = vmatpush1.msra.mxu0 %v258
        %322 = vmatprep.subr.mxu0 0.0
        %323 = vmatpush1.msra.mxu0 %v259
        %324 = vmatprep.subr.mxu0 0.0
        %325 = vmatpush1.msra.mxu0 %v260
        %326 = vmatprep.subr.mxu0 0.0
        %327 = vmatpush1.msra.mxu0 %v261
        %328 = vmatprep.subr.mxu0 0.0
        %329 = vmatpush1.msra.mxu0 %v262
        %330 = vmatprep.subr.mxu0 0.0
        %331 = vmatpush1.msra.mxu0 %v263
        %332 = vmatprep.subr.mxu0 0.0
        %333 = vmatpush1.msra.mxu0 %v264
        %334 = vmatprep.subr.mxu0 0.0
        %335 = vmatpush1.msra.mxu0 %v265
        %336 = vmatprep.subr.mxu0 0.0
        %337 = vmatpush1.msra.mxu0 %v266
        %338 = vmatprep.mubr.f32.mxu0 %v230
        %339 = vmatmul.mubr.f32.gmra.mrb[0].mxu0 %v229
        %v340 = vpop.f32.mrb[0].mxu0
        %v341 = vadd.f32 %v272, %v340
        %v342 = vpop.f32.mrb[0].mxu0
        %343 = vmatprep.mubr.f32.mxu0 %v232
        %344 = vmatmul.mubr.f32.gmra.mrb[0].mxu0 %v231
        %v345 = vpop.f32.mrb[0].mxu0
        %v346 = vadd.f32 %v272, %v345
        %v347 = vpop.f32.mrb[0].mxu0
        %348 = vmatprep.mubr.f32.mxu0 %v234
        %349 = vmatmul.mubr.f32.gmra.mrb[0].mxu0 %v233
        %v350 = vpop.f32.mrb[0].mxu0
        %v351 = vadd.f32 %v272, %v350
        %v352 = vpop.f32.mrb[0].mxu0
        %353 = vdwg.mxu0
        %v354 = vmul.f32 %v341, 0.5
        %v355 = vmul.f32 %v346, 0.5
        %v356 = vmul.f32 %v351, 0.5
        %v357 = vrcp.pop 1.4142135
        %v358 = vmul.f32 %v341, %v357
        %v359 = vmul.f32 %v346, %v357
        %v360 = vmul.f32 %v351, %v357
        %v361 = verf.f32.pop %v358
        %v362 = verf.f32.pop %v359
        %v363 = verf.f32.pop %v360
        %v364 = vadd.f32 %v361, 1.0
        %v365 = vadd.f32 %v362, 1.0
        %v366 = vadd.f32 %v363, 1.0
        %v367 = vmul.f32 %v354, %v364
        %v368 = vmul.f32 %v355, %v365
        %v369 = vmul.f32 %v356, %v366
        %v370 = vld [vmem:[%s3] sm:$0xff]
        %v371 = vld [vmem:[%s3 + $0x8] sm:$0xff]
        %v372 = vld [vmem:[%s3 + $0x10] sm:$0xff]
        %v373 = vld [vmem:[%s3 + $0x18] sm:$0xff]
        %v374 = vld [vmem:[%s3 + $0x20] sm:$0xff]
        %v375 = vld [vmem:[%s3 + $0x28] sm:$0xff]
        %v376 = vld [vmem:[%s3 + $0x30] sm:$0xff]
        %v377 = vld [vmem:[%s3 + $0x38] sm:$0xff]
        %v378 = vld [vmem:[%s3 + $0x40] sm:$0xff]
        %v379 = vld [vmem:[%s3 + $0x48] sm:$0xff]
        %v380 = vld [vmem:[%s3 + $0x50] sm:$0xff]
        %v381 = vld [vmem:[%s3 + $0x58] sm:$0xff]
        %v382 = vld [vmem:[%s3 + $0x60] sm:$0xff]
        %v383 = vld [vmem:[%s3 + $0x68] sm:$0xff]
        %v384 = vld [vmem:[%s3 + $0x70] sm:$0xff]
        %v385 = vld [vmem:[%s3 + $0x78] sm:$0xff]
        %v386 = vld [vmem:[%s3 + $0x80] sm:$0xff]
        %v387 = vld [vmem:[%s3 + $0x88] sm:$0xff]
        %v388 = vld [vmem:[%s3 + $0x90] sm:$0xff]
        %v389 = vld [vmem:[%s3 + $0x98] sm:$0xff]
        %v390 = vld [vmem:[%s3 + $0xa0] sm:$0xff]
        %v391 = vld [vmem:[%s3 + $0xa8] sm:$0xff]
        %v392 = vld [vmem:[%s3 + $0xb0] sm:$0xff]
        %v393 = vld [vmem:[%s3 + $0xb8] sm:$0xff]
        %vm394 = vcmask 523264
        %v396 = vsel %vm394, %v367, 0
        %v399 = vsel %vm394, %v368, 0
        %v402 = vsel %vm394, %v369, 0
        %404 = vmatprep.subr.mxu0 %v371
        %405 = vmatpush1.msra.mxu0 %v370
        %406 = vmatprep.subr.mxu0 %v374
        %407 = vmatpush1.msra.mxu0 %v373
        %408 = vmatprep.subr.mxu0 %v377
        %409 = vmatpush1.msra.mxu0 %v376
        %410 = vmatprep.subr.mxu0 %v380
        %411 = vmatpush1.msra.mxu0 %v379
        %412 = vmatprep.subr.mxu0 %v383
        %413 = vmatpush1.msra.mxu0 %v382
        %414 = vmatprep.subr.mxu0 %v386
        %415 = vmatpush1.msra.mxu0 %v385
        %416 = vmatprep.subr.mxu0 %v389
        %417 = vmatpush1.msra.mxu0 %v388
        %418 = vmatprep.subr.mxu0 %v392
        %419 = vmatpush1.msra.mxu0 %v391
        %420 = vmatprep.subr.mxu0 0.0
        %421 = vmatpush1.msra.mxu0 0.0
        %422 = vmatprep.subr.mxu0 0.0
        %423 = vmatpush1.msra.mxu0 0.0
        %424 = vmatprep.subr.mxu0 0.0
        %425 = vmatpush1.msra.mxu0 0.0
        %426 = vmatprep.subr.mxu0 0.0
        %427 = vmatpush1.msra.mxu0 0.0
        %428 = vmatprep.subr.mxu0 0.0
        %429 = vmatpush1.msra.mxu0 0.0
        %430 = vmatprep.subr.mxu0 0.0
        %431 = vmatpush1.msra.mxu0 0.0
        %432 = vmatprep.subr.mxu0 0.0
        %433 = vmatpush1.msra.mxu0 0.0
        %434 = vmatprep.subr.mxu0 0.0
        %435 = vmatpush1.msra.mxu0 0.0
        %436 = vmatprep.subr.mxu0 0.0
        %437 = vmatpush1.msra.mxu0 0.0
        %438 = vmatprep.subr.mxu0 0.0
        %439 = vmatpush1.msra.mxu0 0.0
        %440 = vmatprep.subr.mxu0 0.0
        %441 = vmatpush1.msra.mxu0 0.0
        %442 = vmatprep.subr.mxu0 0.0
        %443 = vmatpush1.msra.mxu0 0.0
        %444 = vmatprep.subr.mxu0 0.0
        %445 = vmatpush1.msra.mxu0 0.0
        %446 = vmatprep.subr.mxu0 0.0
        %447 = vmatpush1.msra.mxu0 0.0
        %448 = vmatprep.subr.mxu0 0.0
        %449 = vmatpush1.msra.mxu0 0.0
        %450 = vmatprep.subr.mxu0 0.0
        %451 = vmatpush1.msra.mxu0 0.0
        %452 = vmatprep.subr.mxu0 0.0
        %453 = vmatpush1.msra.mxu0 0.0
        %454 = vmatprep.subr.mxu0 0.0
        %455 = vmatpush1.msra.mxu0 0.0
        %456 = vmatprep.subr.mxu0 0.0
        %457 = vmatpush1.msra.mxu0 0.0
        %458 = vmatprep.subr.mxu0 0.0
        %459 = vmatpush1.msra.mxu0 0.0
        %460 = vmatprep.subr.mxu0 0.0
        %461 = vmatpush1.msra.mxu0 0.0
        %462 = vmatprep.subr.mxu0 0.0
        %463 = vmatpush1.msra.mxu0 0.0
        %464 = vmatprep.subr.mxu0 0.0
        %465 = vmatpush1.msra.mxu0 0.0
        %466 = vmatprep.subr.mxu0 0.0
        %467 = vmatpush1.msra.mxu0 0.0
        %468 = vmatprep.mubr.f32.mxu0 0.0
        %469 = vmatmul.mubr.f32.gmra.mrb[0].mxu0 %v396
        %v470 = vpop.f32.mrb[0].mxu0
        %v471 = vadd.f32 0.0, %v470
        %v472 = vpop.f32.mrb[0].mxu0
        %v473 = vadd.f32 0.0, %v472
        %474 = vmatprep.mubr.f32.mxu0 0.0
        %475 = vmatmul.mubr.f32.gmra.mrb[0].mxu0 %v399
        %v476 = vpop.f32.mrb[0].mxu0
        %v477 = vadd.f32 0.0, %v476
        %v478 = vpop.f32.mrb[0].mxu0
        %v479 = vadd.f32 0.0, %v478
        %480 = vmatprep.mubr.f32.mxu0 0.0
        %481 = vmatmul.mubr.f32.gmra.mrb[0].mxu0 %v402
        %v482 = vpop.f32.mrb[0].mxu0
        %v483 = vadd.f32 0.0, %v482
        %v484 = vpop.f32.mrb[0].mxu0
        %v485 = vadd.f32 0.0, %v484
        %486 = vdwg.mxu0
        %487 = vmatprep.subr.mxu0 0.0
        %488 = vmatpush1.msra.mxu0 %v372
        %489 = vmatprep.subr.mxu0 0.0
        %490 = vmatpush1.msra.mxu0 %v375
        %491 = vmatprep.subr.mxu0 0.0
        %492 = vmatpush1.msra.mxu0 %v378
        %493 = vmatprep.subr.mxu0 0.0
        %494 = vmatpush1.msra.mxu0 %v381
        %495 = vmatprep.subr.mxu0 0.0
        %496 = vmatpush1.msra.mxu0 %v384
        %497 = vmatprep.subr.mxu0 0.0
        %498 = vmatpush1.msra.mxu0 %v387
        %499 = vmatprep.subr.mxu0 0.0
        %500 = vmatpush1.msra.mxu0 %v390
        %501 = vmatprep.subr.mxu0 0.0
        %502 = vmatpush1.msra.mxu0 %v393
        %503 = vmatprep.subr.mxu0 0.0
        %504 = vmatpush1.msra.mxu0 0.0
        %505 = vmatprep.subr.mxu0 0.0
        %506 = vmatpush1.msra.mxu0 0.0
        %507 = vmatprep.subr.mxu0 0.0
        %508 = vmatpush1.msra.mxu0 0.0
        %509 = vmatprep.subr.mxu0 0.0
        %510 = vmatpush1.msra.mxu0 0.0
        %511 = vmatprep.subr.mxu0 0.0
        %512 = vmatpush1.msra.mxu0 0.0
        %513 = vmatprep.subr.mxu0 0.0
        %514 = vmatpush1.msra.mxu0 0.0
        %515 = vmatprep.subr.mxu0 0.0
        %516 = vmatpush1.msra.mxu0 0.0
        %517 = vmatprep.subr.mxu0 0.0
        %518 = vmatpush1.msra.mxu0 0.0
        %519 = vmatprep.subr.mxu0 0.0
        %520 = vmatpush1.msra.mxu0 0.0
        %521 = vmatprep.subr.mxu0 0.0
        %522 = vmatpush1.msra.mxu0 0.0
        %523 = vmatprep.subr.mxu0 0.0
        %524 = vmatpush1.msra.mxu0 0.0
        %525 = vmatprep.subr.mxu0 0.0
        %526 = vmatpush1.msra.mxu0 0.0
        %527 = vmatprep.subr.mxu0 0.0
        %528 = vmatpush1.msra.mxu0 0.0
        %529 = vmatprep.subr.mxu0 0.0
        %530 = vmatpush1.msra.mxu0 0.0
        %531 = vmatprep.subr.mxu0 0.0
        %532 = vmatpush1.msra.mxu0 0.0
        %533 = vmatprep.subr.mxu0 0.0
        %534 = vmatpush1.msra.mxu0 0.0
        %535 = vmatprep.subr.mxu0 0.0
        %536 = vmatpush1.msra.mxu0 0.0
        %537 = vmatprep.subr.mxu0 0.0
        %538 = vmatpush1.msra.mxu0 0.0
        %539 = vmatprep.subr.mxu0 0.0
        %540 = vmatpush1.msra.mxu0 0.0
        %541 = vmatprep.subr.mxu0 0.0
        %542 = vmatpush1.msra.mxu0 0.0
        %543 = vmatprep.subr.mxu0 0.0
        %544 = vmatpush1.msra.mxu0 0.0
        %545 = vmatprep.subr.mxu0 0.0
        %546 = vmatpush1.msra.mxu0 0.0
        %547 = vmatprep.subr.mxu0 0.0
        %548 = vmatpush1.msra.mxu0 0.0
        %549 = vmatprep.subr.mxu0 0.0
        %550 = vmatpush1.msra.mxu0 0.0
        %551 = vmatprep.mubr.f32.mxu0 0.0
        %552 = vmatmul.mubr.f32.gmra.mrb[0].mxu0 %v396
        %v553 = vpop.f32.mrb[0].mxu0
        %v554 = vadd.f32 0.0, %v553
        %v555 = vpop.f32.mrb[0].mxu0
        %556 = vmatprep.mubr.f32.mxu0 0.0
        %557 = vmatmul.mubr.f32.gmra.mrb[0].mxu0 %v399
        %v558 = vpop.f32.mrb[0].mxu0
        %v559 = vadd.f32 0.0, %v558
        %v560 = vpop.f32.mrb[0].mxu0
        %561 = vmatprep.mubr.f32.mxu0 0.0
        %562 = vmatmul.mubr.f32.gmra.mrb[0].mxu0 %v402
        %v563 = vpop.f32.mrb[0].mxu0
        %v564 = vadd.f32 0.0, %v563
        %v565 = vpop.f32.mrb[0].mxu0
        %566 = vdwg.mxu0
        %v567 = vlaneseq
        %v568 = vshrl.u32 %v567, 7
        %v569 = vadd.s32 %v568, 8
        %v570 = vadd.s32 %v568, 16
        %vm571 = vcmp.lt.s32.totalorder %v568, 0
        %v572 = vsub.s32 0, %v568
        %v573 = vsel %vm571, %v572, %v568
        %v574 = vshrl.u32 %v573, 3
        %v575 = vand.u32 %v573, 7
        %v576 = vsub.s32 0, %v575
        %v577 = vsel %vm571, %v576, %v575
        %vm578 = vcmp.lt.s32.totalorder %v569, 0
        %v579 = vsub.s32 0, %v569
        %v580 = vsel %vm578, %v579, %v569
        %v581 = vshrl.u32 %v580, 3
        %v582 = vand.u32 %v580, 7
        %v583 = vsub.s32 0, %v582
        %v584 = vsel %vm578, %v583, %v582
        %vm585 = vcmp.lt.s32.totalorder %v570, 0
        %v586 = vsub.s32 0, %v570
        %v587 = vsel %vm585, %v586, %v570
        %v588 = vshrl.u32 %v587, 3
        %v589 = vand.u32 %v587, 7
        %v590 = vsub.s32 0, %v589
        %v591 = vsel %vm585, %v590, %v589
        %vm592 = vcmp.ne.s32.totalorder %v577, 0
        %vm593 = vcmp.ne.s32.totalorder %v584, 0
        %vm594 = vcmp.ne.s32.totalorder %v591, 0
        %vm595 = vcmp.lt.s32.totalorder %v577, 0
        %vm596 = vcmp.lt.s32.totalorder %v584, 0
        %vm597 = vcmp.lt.s32.totalorder %v591, 0
        %vm598 = vmand %vm595, %vm592
        %vm599 = vmand %vm596, %vm593
        %vm600 = vmand %vm597, %vm594
        %v601 = vadd.s32 %v577, 8
        %v602 = vadd.s32 %v584, 8
        %v603 = vadd.s32 %v591, 8
        %v604 = vsel %vm598, %v601, %v577
        %v605 = vsel %vm599, %v602, %v584
        %v606 = vsel %vm600, %v603, %v591
        %vm607 = vcmp.ne.s32.totalorder %v604, 0
        %vm608 = vcmp.ne.s32.totalorder %v605, 0
        %vm609 = vcmp.ne.s32.totalorder %v606, 0
        %v610 = vrot.slane %v471, 7
        %v611 = vrot.slane %v477, 7
        %v612 = vrot.slane %v483, 7
        %vm613 = vcmp.lt.s32.totalorder %v568, 1
        %v614 = vsel %vm613, %v611, %v612
        %v615 = vsel %vm613, %v610, %v611
        %v616 = vsel %vm613, %v612, %v610
        %v617 = vsel %vm607, %v616, 0.0
        %v618 = vsel %vm608, %v615, 0.0
        %v619 = vsel %vm609, %v614, 0.0
        %vm620 = vcmp.ne.s32.totalorder %v604, 7
        %vm621 = vcmp.ne.s32.totalorder %v605, 7
        %vm622 = vcmp.ne.s32.totalorder %v606, 7
        %v623 = vrot.slane %v554, 1
        %v624 = vrot.slane %v559, 1
        %v625 = vrot.slane %v564, 1
        %vm626 = vcmp.lt.s32.totalorder %v568, 7
        %v627 = vsel %vm626, %v624, %v625
        %v628 = vsel %vm626, %v623, %v624
        %v629 = vsel %vm626, %v625, %v623
        %v630 = vsel %vm620, %v628, 0.0
        %v631 = vsel %vm621, %v627, 0.0
        %v632 = vsel %vm622, %v629, 0.0
        %v633 = vadd.f32 %v473, %v617
        %v634 = vadd.f32 %v479, %v618
        %v635 = vadd.f32 %v485, %v619
        %v636 = vadd.f32 %v633, %v630
        %v637 = vadd.f32 %v634, %v631
        %v638 = vadd.f32 %v635, %v632
        %v639 = vld [vmem:[%s4] sm:$0x1]
        %v641 = vlaneseq
        %v642 = vshrl.u32 %v641, 7
        %v643 = vsub.s32 0, %v642
        %v644 = vrot.slane %v639, %v643
        %v646 = vadd.f32 %v636, %v644
        %v647 = vadd.f32 %v637, %v644
        %v648 = vadd.f32 %v638, %v644
        %649 = vst [vmem:[%s220] sm:$0xff] %v646
        %650 = vst [vmem:[%s220 + $0x8] sm:$0xff] %v647
        %651 = vst [vmem:[%s220 + $0x10] sm:$0xff] %v648
        %s652 = sand.u32 %s137, 1
        %s653 = scalar_lea.sflag [#allocation3], %s652
        %s654 = sand.u32 %s137, 1
        %s655 = smul.addr %s654, 24
        %s656 = scalar_lea.vmem [#allocation2], %s655
        // Predicated region
        $region41: #{tpu_custom_call.1} parent=39 // pred_check
          %p657 = pneg %p147
        $region42: #{tpu_custom_call.1} parent=39 // pred_check_branch
          %659 = sbr.rel (%p657) target = $region44
        $region43: #{tpu_custom_call.1} parent=39 // pred_region
          %s660 = smul.u32 3, %s19
          %s662 = ssub.s32 384, 384
          %663 = vsyncadd %s653, %s662
          %s664 = smul.addr %s660, 128
          %s665 = scalar_lea.hbm %s5, %s664
          %s666 = sshll.u32 %s656, 4
          %s667 = int_to_ptr.vmem [resolvable:$true] %s666
          %672 = dma.vmem_to_hbm [thread:$0]  %s667, 384, %s665, %s653, 128, 128, 8
        $region44: #{tpu_custom_call.1} parent=39 // pred_fallthru
          _
      $region40: #{tpu_custom_call.1} parent=5 // pred_fallthru
        _
      %p673 = scmp.le.s32.totalorder 2, %s14
      // Predicated region
      $region45: #{tpu_custom_call.1} parent=5 // pred_check
        %p674 = pneg %p673
      $region46: #{tpu_custom_call.1} parent=5 // pred_check_branch
        %676 = sbr.rel (%p674) target = $region48
      $region47: #{tpu_custom_call.1} parent=5 // pred_region
        %s677 = ssub.s32 %s14, 2
        // Predicated region
        $region49: #{tpu_custom_call.1} parent=47 // pred_check
          %p678 = pneg %p153
        $region50: #{tpu_custom_call.1} parent=47 // pred_check_branch
          %680 = sbr.rel (%p678) target = $region52
        $region51: #{tpu_custom_call.1} parent=47 // pred_region
          %s681 = sand.u32 %s138, 1
          %s682 = scalar_lea.sflag [#allocation3], %s681
          %s683 = sand.u32 %s138, 1
          %s684 = smul.addr %s683, 24
          %s685 = scalar_lea.vmem [#allocation2], %s684
          %686 = dma.done %s682, 384
        $region52: #{tpu_custom_call.1} parent=47 // pred_fallthru
          _
      $region48: #{tpu_custom_call.1} parent=5 // pred_fallthru
        _
    $region6: #{tpu_custom_call.1} parent=1 // loop_footer
      %s18 = sadd.s32 1, %s14
    $region7: #{tpu_custom_call.1} parent=1 // loop_footer_branch
      %13 = sbr.rel target = $region3
    $region8: #{tpu_custom_call.1} parent=1 // loop_exit
      _
    %687 = vsyncpa [#allocation3], 1
    %s688 = scalar_lea.sflag [#allocation3], 1
    %689 = vsyncpa %s688, 1

</llo_original>
